<compile_context>
chip_gen: v6e
topology: v6e:2x2x1
jax: 0.10.0
libtpu: 0.0.40
codegen_flags: <defaults>
</compile_context>

<pallas_src>
import jax
import jax.numpy as jnp
from jax import lax
from jax.experimental import pallas as pl
from jax.experimental.pallas import tpu as pltpu


def _embed_kernel(idx_ref, embt_ref, out_ref):
    # idx_ref:  (1, 1, TN) int32 token ids for this tile (lane-dense)
    # embt_ref: (E, Vp)    float32 transposed, vocab-padded embedding table
    # out_ref:  (E, TN)    float32 transposed gathered embeddings (lane-dense)
    idx = idx_ref[0]                                     # (1, TN)
    vp = embt_ref.shape[1]
    tn = idx.shape[1]
    # one-hot over the (padded) vocab axis; gather via a single MXU matmul.
    onehot = (lax.broadcasted_iota(jnp.int32, (vp, tn), 0) == idx).astype(jnp.float32)
    out_ref[...] = jnp.dot(
        embt_ref[...], onehot, preferred_element_type=jnp.float32
    )


def char_embed_lookup(indices, emb_table, *, max_tile_tokens=8192,
                      num_parallel_steps=2):
    """indices: int array of any shape; emb_table: (V, E) float32.

    Returns float32 array of shape indices.shape + (E,).
    """
    orig_shape = indices.shape
    v, e = emb_table.shape
    flat = indices.reshape(-1).astype(jnp.int32)
    n = flat.shape[0]

    # Pad the vocab (contraction) axis to a multiple of 128: full-width MXU
    # contraction, no masked lanes in the one-hot vregs. Padded columns are
    # zero and unreachable by valid ids, so forward semantics are unchanged.
    v_pad = max(pl.cdiv(v, 128) * 128, 128)
    emb_t = emb_table.T.astype(jnp.float32)              # (E, V)
    if v_pad != v:
        emb_t = jnp.pad(emb_t, ((0, 0), (0, v_pad - v)))  # (E, Vp)

    # Tile sizing: aim for `num_parallel_steps` fat grid steps (megacore on
    # v7x; per-step pipeline overhead is negligible with fat tiles), with a
    # cap that keeps the (Vp, TN) one-hot + double-buffered (E, TN) output
    # tile comfortably inside the most conservative scoped-VMEM default.
    tile_tokens = pl.cdiv(pl.cdiv(n, num_parallel_steps), 128) * 128
    tile_tokens = max(128, min(tile_tokens, max_tile_tokens))
    n_steps = pl.cdiv(n, tile_tokens)
    n_pad = n_steps * tile_tokens

    if n_pad != n:
        # Pad only when needed; pad ids are 0 and their rows are sliced off.
        flat = jnp.pad(flat, (0, n_pad - n))
    idx3d = flat.reshape(n_steps, 1, tile_tokens)

    out_t = pl.pallas_call(
        _embed_kernel,
        out_shape=jax.ShapeDtypeStruct((e, n_pad), jnp.float32),
        grid_spec=pltpu.PrefetchScalarGridSpec(
            num_scalar_prefetch=0,
            grid=(n_steps,),
            in_specs=[
                pl.BlockSpec((1, 1, tile_tokens), lambda i: (i, 0, 0)),  # ids
                pl.BlockSpec((e, v_pad), lambda i: (0, 0)),              # table^T
            ],
            out_specs=pl.BlockSpec((e, tile_tokens), lambda i: (0, i)),
        ),
        compiler_params=pltpu.CompilerParams(
            dimension_semantics=("parallel",),
        ),
    )(idx3d, emb_t)

    out = out_t.T[:n]                                    # (n, E)
    return out.reshape(*orig_shape, e)


def make_char_embed_params(key, num_vocab, embed_size, normalize=True):
    """Deterministic synthetic init mirroring CharEmbed.__init__."""
    w = jax.random.uniform(
        key, (num_vocab, embed_size), dtype=jnp.float32, minval=-0.25, maxval=0.25
    )
    if normalize:
        norms = jnp.linalg.norm(w, ord=2, axis=1, keepdims=True)
        w = w / norms
    return w


if __name__ == "__main__":
    key = jax.random.PRNGKey(0)
    k_w, k_idx = jax.random.split(key)

    # Synthetic char vocab: 64 entries including <pad>=0, <oov>=1.
    num_vocab = 64
    embed_size = 32
    batch, seq_len, word_len = 2, 8, 16   # char ids per word

    emb_table = make_char_embed_params(k_w, num_vocab, embed_size, normalize=True)

    char_ids = jax.random.randint(
        k_idx, (batch, seq_len, word_len), minval=0, maxval=num_vocab, dtype=jnp.int32
    )

    out = char_embed_lookup(char_ids, emb_table)
    out = jax.block_until_ready(out)

    # Reference check (plain JAX gather).
    ref = jnp.take(emb_table, char_ids, axis=0)
    assert out.shape == (batch, seq_len, word_len, embed_size)
    assert jnp.allclose(out, ref, atol=1e-6), "mismatch vs reference gather"

    print("KERNEL_OK")
</pallas_src>

<mosaic_0001>
module attributes {stable_mosaic.version = 11 : i64} {
  func.func @_embed_kernel(%arg0: i32, %arg1: memref<1x1x128xi32, #tpu.memory_space<vmem>>, %arg2: memref<32x128xf32, #tpu.memory_space<vmem>>, %arg3: memref<32x128xf32, #tpu.memory_space<vmem>>) attributes {dimension_semantics = [#tpu.dimension_semantics<parallel>], iteration_bounds = array<i64: 2>, scalar_prefetch = 0 : i64, scratch_operands = 0 : i64, tpu.core_type = #tpu.core_type<tc>, window_params = [{transform_indices = @transform_0, window_bounds = array<i64: 1, 1, 128>}, {pipeline_mode = #tpu.pipeline_mode<synchronous>, transform_indices = @transform_1, window_bounds = array<i64: 32, 128>}, {transform_indices = @transform_2, window_bounds = array<i64: 32, 128>}]} {
    %c0 = arith.constant 0 : index
    %c0_0 = arith.constant 0 : index
    %c0_1 = arith.constant 0 : index
    %0 = vector.load %arg1[%c0, %c0_0, %c0_1] : memref<1x1x128xi32, #tpu.memory_space<vmem>>, vector<1x1x128xi32>
    %1 = vector.shape_cast %0 : vector<1x1x128xi32> to vector<1x128xi32>
    %2 = tpu.iota {dimensions = array<i32: 0>} : vector<128x128xi32>
    %3 = vector.broadcast %1 : vector<1x128xi32> to vector<128x128xi32>
    %4 = arith.cmpi eq, %2, %3 : vector<128x128xi32>
    %5 = arith.extui %4 : vector<128x128xi1> to vector<128x128xi32>
    %6 = arith.sitofp %5 : vector<128x128xi32> to vector<128x128xf32>
    %c0_2 = arith.constant 0 : index
    %c0_3 = arith.constant 0 : index
    %7 = vector.load %arg2[%c0_2, %c0_3] : memref<32x128xf32, #tpu.memory_space<vmem>>, vector<32x128xf32>
    %cst = arith.constant dense<0.000000e+00> : vector<32x128xf32>
    %8 = tpu.matmul %7, %6, %cst {dimension_numbers = #tpu.dot_dimension_numbers<[1], [0], [0], [1], [0, 0, 1, 1], [], []>} : vector<32x128xf32>, vector<128x128xf32>, vector<32x128xf32> -> vector<32x128xf32>
    %c0_4 = arith.constant 0 : index
    %c0_5 = arith.constant 0 : index
    %9 = vector.load %arg3[%c0_4, %c0_5] : memref<32x128xf32, #tpu.memory_space<vmem>>, vector<32x128xf32>
    tpu.vector_store %arg3[%c0_4, %c0_5], %8 {strides = array<i32>} : memref<32x128xf32, #tpu.memory_space<vmem>>, vector<32x128xf32>,
    return
  }
  func.func @transform_0(%arg0: i32) -> (i32, i32, i32) {
    %c0_i32 = arith.constant 0 : i32
    %c0_i32_0 = arith.constant 0 : i32
    %c0_i32_1 = arith.constant 0 : i32
    return %arg0, %c0_i32, %c0_i32_0 : i32, i32, i32
  }
  func.func @transform_1(%arg0: i32) -> (i32, i32) {
    %c0_i32 = arith.constant 0 : i32
    %c0_i32_0 = arith.constant 0 : i32
    %c0_i32_1 = arith.constant 0 : i32
    return %c0_i32, %c0_i32_0 : i32, i32
  }
  func.func @transform_2(%arg0: i32) -> (i32, i32) {
    %c0_i32 = arith.constant 0 : i32
    %c0_i32_0 = arith.constant 0 : i32
    return %c0_i32, %arg0 : i32, i32
  }
}

</mosaic_0001>

<llo_original>
// kernel: tpu_custom_call.1
$region0: #{tpu_custom_call.1}
  #allocation0 [shape = 'u32[]', space=smem, size = 0x4, offset = 0x4, fixed_abs, tag = 'smem constant byte address 0x4 - core index']
  #allocation1 [shape = 'u32[144,128]{1,0:T(1,128)}', space=vmem, size = 0x12000, scoped, tag = 'internal scratch']
  %s0 = inlined_call_operand.hbm [shape: s32[2,1,128], index: 0, kind: input, shape index: {}]
  %s1 = inlined_call_operand.hbm [shape: f32[32,128], index: 1, kind: input, shape index: {}]
  %s2 = inlined_call_operand.hbm [shape: f32[32,256], index: 2, kind: output, shape index: {}]
  %s3 = sld [smem:[#allocation0]]
  $region49: #{tpu_custom_call.1} parent=0
    _
  %s5 = ssub.s32 1, %s3
  %s6 = scalar_select 0, %s5, %s3
  $region1: #{tpu_custom_call.1} parent=0
    #allocation2 [shape = 'u8[1024]{0}', space=vmem, size = 0x400, scoped, tag = 'input window, operand 0']
    #allocation3 [shape = 's32[2]{0}', space=sflag, size = 0x8, scoped, tag = 'scoped memory for tpu_custom_call.1']
    #allocation4 [shape = 's32[2]{0}', space=sflag, size = 0x8, scoped, tag = 'scoped memory for tpu_custom_call.1']
    #allocation5 [shape = 'u8[16384]{0}', space=vmem, size = 0x4000, scoped, tag = 'input window, operand 1, single buffered']
    #allocation6 [shape = 's32[1]{0}', space=sflag, size = 0x4, scoped, tag = 'scoped memory for tpu_custom_call.1']
    #allocation7 [shape = 'u8[32768]{0}', space=vmem, size = 0x8000, scoped, tag = 'output window, operand 0']
    %7 = vsyncpa [#allocation3], 0
    %s8 = scalar_lea.sflag [#allocation3], 1
    %9 = vsyncpa %s8, 0
    %10 = vsyncpa [#allocation6], 0
    %11 = vsyncpa [#allocation4], 0
    %s12 = scalar_lea.sflag [#allocation4], 1
    %13 = vsyncpa %s12, 0
    loop: start=0, step=1, limit=4
    $region2: #{tpu_custom_call.1} parent=1 // loop_pre_header
      _
    $region3: #{tpu_custom_call.1} parent=1 // loop_header
      %s15 = sphi 0, %s19
      %p16 = scmp.ge.s32.totalorder %s15, 4
      %s25 = sphi 0, %s27
      %s28 = sphi 0, %s25
      %s29 = sphi 0, %s28
      %s45 = sphi 0, %s29
      %s49 = sphi 0, %s49
      %s51 = sphi 0, %s49
      %s52 = sphi 0, %s51
      %s66 = sphi 0, %s52
      %s72 = sphi 0, %s74
      %s75 = sphi 0, %s72
      %s76 = sphi 0, %s75
      %s92 = sphi 0, %s76
    $region4: #{tpu_custom_call.1} parent=1 // loop_header_branch
      %18 = sbr.rel (%p16) target = $region8
    $region5: #{tpu_custom_call.1} parent=1 // loop_body
      %s20 = ssub.s32 %s15, 1
      %s21 = ssub.s32 %s15, 2
      %s22 = sadd.s32 %s15, 1
      %s23 = ssub.s32 %s15, %s22
      %p24 = scmp.eq.s32.totalorder %s23, 0
      %s26 = sadd.s32 %s25, 1
      %s27 = scalar_select %p24, %s25, %s26
      %p30 = pneg %p24
      %p31 = scmp.eq.s32.totalorder %s15, 1
      %p32 = por %p30, %p31
      %p33 = scmp.ne.s32.totalorder %s25, %s28
      %p34 = scmp.eq.s32.totalorder %s15, 0
      %p35 = por %p33, %p34
      %p36 = scmp.ne.s32.totalorder %s25, %s28
      %p37 = scmp.eq.s32.totalorder %s20, 1
      %p38 = por %p36, %p37
      %p39 = scmp.ne.s32.totalorder %s28, %s29
      %p40 = scmp.eq.s32.totalorder %s20, 0
      %p41 = por %p39, %p40
      %p42 = scmp.ne.s32.totalorder %s28, %s29
      %p43 = scmp.eq.s32.totalorder %s21, 1
      %p44 = por %p42, %p43
      %p46 = scmp.ne.s32.totalorder %s29, %s45
      %p47 = scmp.eq.s32.totalorder %s21, 0
      %p48 = por %p46, %p47
      %s50 = sadd.s32 %s49, 1
      %p53 = scmp.eq.s32.totalorder %s15, 1
      %p54 = scmp.ne.s32.totalorder %s49, %s51
      %p55 = scmp.eq.s32.totalorder %s15, 0
      %p56 = por %p54, %p55
      %p57 = scmp.ne.s32.totalorder %s49, %s51
      %p58 = scmp.eq.s32.totalorder %s20, 1
      %p59 = por %p57, %p58
      %p60 = scmp.ne.s32.totalorder %s51, %s52
      %p61 = scmp.eq.s32.totalorder %s20, 0
      %p62 = por %p60, %p61
      %p63 = scmp.ne.s32.totalorder %s51, %s52
      %p64 = scmp.eq.s32.totalorder %s21, 1
      %p65 = por %p63, %p64
      %p67 = scmp.ne.s32.totalorder %s52, %s66
      %p68 = scmp.eq.s32.totalorder %s21, 0
      %p69 = por %p67, %p68
      %s70 = ssub.s32 %s15, %s22
      %p71 = scmp.eq.s32.totalorder %s70, 0
      %s73 = sadd.s32 %s72, 1
      %s74 = scalar_select %p71, %s72, %s73
      %p77 = pneg %p71
      %p78 = scmp.eq.s32.totalorder %s15, 1
      %p79 = por %p77, %p78
      %p80 = scmp.ne.s32.totalorder %s72, %s75
      %p81 = scmp.eq.s32.totalorder %s15, 0
      %p82 = por %p80, %p81
      %p83 = scmp.ne.s32.totalorder %s72, %s75
      %p84 = scmp.eq.s32.totalorder %s20, 1
      %p85 = por %p83, %p84
      %p86 = scmp.ne.s32.totalorder %s75, %s76
      %p87 = scmp.eq.s32.totalorder %s20, 0
      %p88 = por %p86, %p87
      %p89 = scmp.ne.s32.totalorder %s75, %s76
      %p90 = scmp.eq.s32.totalorder %s21, 1
      %p91 = por %p89, %p90
      %p93 = scmp.ne.s32.totalorder %s76, %s92
      %p94 = scmp.eq.s32.totalorder %s21, 0
      %p95 = por %p93, %p94
      %p96 = scmp.le.s32.totalorder 1, %s15
      %p97 = scmp.lt.s32.totalorder %s15, 3
      %p98 = pnand %p96, %p97
      %p99 = pneg %p98
      // Predicated region
      $region9: #{tpu_custom_call.1} parent=5 // pred_check
        _
      $region10: #{tpu_custom_call.1} parent=5 // pred_check_branch
        %101 = sbr.rel (%p98) target = $region12
      $region11: #{tpu_custom_call.1} parent=5 // pred_region
        %s102 = ssub.s32 %s15, 1
        // Predicated region
        $region13: #{tpu_custom_call.1} parent=11 // pred_check
          %p103 = pneg %p62
        $region14: #{tpu_custom_call.1} parent=11 // pred_check_branch
          %105 = sbr.rel (%p103) target = $region16
        $region15: #{tpu_custom_call.1} parent=11 // pred_region
          %s107 = ssub.s32 512, 512
          %108 = vsyncadd [#allocation6], %s107
          %s109 = sshll.u32 [#allocation5], 4
          %s110 = int_to_ptr.vmem [resolvable:$true] %s109
          %115 = dma.hbm_to_vmem [thread:$0]  %s1, 512, %s110, [#allocation6], 128, 128, 8
        $region16: #{tpu_custom_call.1} parent=11 // pred_fallthru
          _
      $region12: #{tpu_custom_call.1} parent=5 // pred_fallthru
        _
      %p116 = scmp.lt.s32.totalorder %s15, 2
      // Predicated region
      $region17: #{tpu_custom_call.1} parent=5 // pred_check
        %p117 = pneg %p116
      $region18: #{tpu_custom_call.1} parent=5 // pred_check_branch
        %119 = sbr.rel (%p117) target = $region20
      $region19: #{tpu_custom_call.1} parent=5 // pred_region
        // Predicated region
        $region21: #{tpu_custom_call.1} parent=19 // pred_check
          %p120 = pneg %p35
        $region22: #{tpu_custom_call.1} parent=19 // pred_check_branch
          %122 = sbr.rel (%p120) target = $region24
        $region23: #{tpu_custom_call.1} parent=19 // pred_region
          %s123 = sand.u32 %s25, 1
          %s124 = scalar_lea.sflag [#allocation3], %s123
          %s125 = sand.u32 %s25, 1
          %s126 = scalar_lea.vmem [#allocation2], %s125
          %s128 = ssub.s32 16, 16
          %129 = vsyncadd %s124, %s128
          %s130 = smul.addr %s15, 16
          %s131 = scalar_lea.hbm %s0, %s130
          %s133 = sshll.u32 %s126, 4
          %s134 = int_to_ptr.vmem [resolvable:$true] %s133
          %136 = dma.hbm_to_vmem [thread:$0]  %s131, 16, %s134, %s124
        $region24: #{tpu_custom_call.1} parent=19 // pred_fallthru
          _
      $region20: #{tpu_custom_call.1} parent=5 // pred_fallthru
        _
      %p137 = scmp.le.s32.totalorder 1, %s15
      %p138 = scmp.lt.s32.totalorder %s15, 3
      %p139 = pnand %p137, %p138
      %p140 = pneg %p139
      // Predicated region
      $region25: #{tpu_custom_call.1} parent=5 // pred_check
        _
      $region26: #{tpu_custom_call.1} parent=5 // pred_check_branch
        %142 = sbr.rel (%p139) target = $region28
      $region27: #{tpu_custom_call.1} parent=5 // pred_region
        %s143 = ssub.s32 %s15, 1
        %s144 = sand.u32 %s28, 1
        %s145 = scalar_lea.sflag [#allocation3], %s144
        %s146 = sand.u32 %s28, 1
        %s147 = scalar_lea.vmem [#allocation2], %s146
        // Predicated region
        $region29: #{tpu_custom_call.1} parent=27 // pred_check
          %p148 = pneg %p41
        $region30: #{tpu_custom_call.1} parent=27 // pred_check_branch
          %150 = sbr.rel (%p148) target = $region32
        $region31: #{tpu_custom_call.1} parent=27 // pred_region
          %151 = dma.done %s145, 16
        $region32: #{tpu_custom_call.1} parent=27 // pred_fallthru
          _
        // Predicated region
        $region33: #{tpu_custom_call.1} parent=27 // pred_check
          %p152 = pneg %p62
        $region34: #{tpu_custom_call.1} parent=27 // pred_check_branch
          %154 = sbr.rel (%p152) target = $region36
        $region35: #{tpu_custom_call.1} parent=27 // pred_region
          %155 = dma.done [#allocation6], 512
        $region36: #{tpu_custom_call.1} parent=27 // pred_fallthru
          _
        %s156 = sand.u32 %s28, 1
        %s157 = scalar_lea.sflag [#allocation3], %s156
        %s158 = sand.u32 %s28, 1
        %s159 = scalar_lea.vmem [#allocation2], %s158
        %p160 = pneg %p41
        %p161 = pneg %p38
        %p162 = pneg %p62
        %p163 = pneg %p59
        %p164 = pneg %p88
        %p165 = pneg %p85
        %s166 = sand.u32 %s75, 1
        %s167 = scalar_lea.sflag [#allocation4], %s166
        %s168 = sand.u32 %s75, 1
        %s169 = smul.addr %s168, 32
        %s170 = scalar_lea.vmem [#allocation7], %s169
        %v171 = vld [vmem:[%s147] sm:$0x1]
        %v172 = vlaneseq
        %v173 = vshrl.u32 %v172, 7
        %v174 = vadd.s32 %v173, 8
        %v175 = vadd.s32 %v173, 16
        %v176 = vadd.s32 %v173, 24
        %v177 = vadd.s32 %v173, 32
        %v178 = vadd.s32 %v173, 40
        %v179 = vadd.s32 %v173, 48
        %v180 = vadd.s32 %v173, 56
        %v181 = vadd.s32 %v173, 64
        %v182 = vadd.s32 %v173, 72
        %v183 = vadd.s32 %v173, 80
        %v184 = vadd.s32 %v173, 88
        %v185 = vadd.s32 %v173, 96
        %v186 = vadd.s32 %v173, 104
        %v187 = vadd.s32 %v173, 112
        %v188 = vadd.s32 %v173, 120
        %v189 = vlaneseq
        %v190 = vshrl.u32 %v189, 7
        %v191 = vsub.s32 0, %v190
        %v192 = vrot.slane %v171, %v191
        %vm193 = vcmp.eq.s32.totalorder %v173, %v192
        %vm194 = vcmp.eq.s32.totalorder %v174, %v192
        %vm195 = vcmp.eq.s32.totalorder %v175, %v192
        %vm196 = vcmp.eq.s32.totalorder %v176, %v192
        %vm197 = vcmp.eq.s32.totalorder %v177, %v192
        %vm198 = vcmp.eq.s32.totalorder %v178, %v192
        %vm199 = vcmp.eq.s32.totalorder %v179, %v192
        %vm200 = vcmp.eq.s32.totalorder %v180, %v192
        %vm201 = vcmp.eq.s32.totalorder %v181, %v192
        %vm202 = vcmp.eq.s32.totalorder %v182, %v192
        %vm203 = vcmp.eq.s32.totalorder %v183, %v192
        %vm204 = vcmp.eq.s32.totalorder %v184, %v192
        %vm205 = vcmp.eq.s32.totalorder %v185, %v192
        %vm206 = vcmp.eq.s32.totalorder %v186, %v192
        %vm207 = vcmp.eq.s32.totalorder %v187, %v192
        %vm208 = vcmp.eq.s32.totalorder %v188, %v192
        %v209 = vsel %vm193, 1, 0
        %v210 = vsel %vm194, 1, 0
        %v211 = vsel %vm195, 1, 0
        %v212 = vsel %vm196, 1, 0
        %v213 = vsel %vm197, 1, 0
        %v214 = vsel %vm198, 1, 0
        %v215 = vsel %vm199, 1, 0
        %v216 = vsel %vm200, 1, 0
        %v217 = vsel %vm201, 1, 0
        %v218 = vsel %vm202, 1, 0
        %v219 = vsel %vm203, 1, 0
        %v220 = vsel %vm204, 1, 0
        %v221 = vsel %vm205, 1, 0
        %v222 = vsel %vm206, 1, 0
        %v223 = vsel %vm207, 1, 0
        %v224 = vsel %vm208, 1, 0
        %v225 = vcvt.s32.f32 %v209
        %v226 = vcvt.s32.f32 %v210
        %v227 = vcvt.s32.f32 %v211
        %v228 = vcvt.s32.f32 %v212
        %v229 = vcvt.s32.f32 %v213
        %v230 = vcvt.s32.f32 %v214
        %v231 = vcvt.s32.f32 %v215
        %v232 = vcvt.s32.f32 %v216
        %v233 = vcvt.s32.f32 %v217
        %v234 = vcvt.s32.f32 %v218
        %v235 = vcvt.s32.f32 %v219
        %v236 = vcvt.s32.f32 %v220
        %v237 = vcvt.s32.f32 %v221
        %v238 = vcvt.s32.f32 %v222
        %v239 = vcvt.s32.f32 %v223
        %v240 = vcvt.s32.f32 %v224
        %v241 = vld [vmem:[#allocation5] sm:$0xff]
        %v242 = vld [vmem:[#allocation5 + $0x8] sm:$0xff]
        %v243 = vld [vmem:[#allocation5 + $0x10] sm:$0xff]
        %v244 = vld [vmem:[#allocation5 + $0x18] sm:$0xff]
        %245 = vmatprep.subr.mxu0 0.0
        %246 = vmatpush1.msra.mxu0 %v240
        %247 = vmatprep.subr.mxu0 0.0
        %248 = vmatpush1.msra.mxu0 %v239
        %249 = vmatprep.subr.mxu0 0.0
        %250 = vmatpush1.msra.mxu0 %v238
        %251 = vmatprep.subr.mxu0 0.0
        %252 = vmatpush1.msra.mxu0 %v237
        %253 = vmatprep.subr.mxu0 0.0
        %254 = vmatpush1.msra.mxu0 %v236
        %255 = vmatprep.subr.mxu0 0.0
        %256 = vmatpush1.msra.mxu0 %v235
        %257 = vmatprep.subr.mxu0 0.0
        %258 = vmatpush1.msra.mxu0 %v234
        %259 = vmatprep.subr.mxu0 0.0
        %260 = vmatpush1.msra.mxu0 %v233
        %261 = vmatprep.subr.mxu0 0.0
        %262 = vmatpush1.msra.mxu0 %v232
        %263 = vmatprep.subr.mxu0 0.0
        %264 = vmatpush1.msra.mxu0 %v231
        %265 = vmatprep.subr.mxu0 0.0
        %266 = vmatpush1.msra.mxu0 %v230
        %267 = vmatprep.subr.mxu0 0.0
        %268 = vmatpush1.msra.mxu0 %v229
        %269 = vmatprep.subr.mxu0 0.0
        %270 = vmatpush1.msra.mxu0 %v228
        %271 = vmatprep.subr.mxu0 0.0
        %272 = vmatpush1.msra.mxu0 %v227
        %273 = vmatprep.subr.mxu0 0.0
        %274 = vmatpush1.msra.mxu0 %v226
        %275 = vmatprep.subr.mxu0 0.0
        %276 = vmatpush1.msra.mxu0 %v225
        %277 = vmatprep.subr.mxu0 0.0
        %278 = vmatpush2.msra.mxu0 0.0
        %279 = vmatprep.subr.mxu0 0.0
        %280 = vmatpush2.msra.mxu0 0.0
        %281 = vmatprep.subr.mxu0 0.0
        %282 = vmatpush2.msra.mxu0 0.0
        %283 = vmatprep.subr.mxu0 0.0
        %284 = vmatpush2.msra.mxu0 0.0
        %285 = vmatprep.subr.mxu0 0.0
        %286 = vmatpush2.msra.mxu0 0.0
        %287 = vmatprep.subr.mxu0 0.0
        %288 = vmatpush2.msra.mxu0 0.0
        %289 = vmatprep.subr.mxu0 0.0
        %290 = vmatpush2.msra.mxu0 0.0
        %291 = vmatprep.subr.mxu0 0.0
        %292 = vmatpush2.msra.mxu0 0.0
        %293 = vmatprep.subr.mxu0 0.0
        %294 = vmatpush2.msra.mxu0 0.0
        %295 = vmatprep.subr.mxu0 0.0
        %296 = vmatpush2.msra.mxu0 0.0
        %297 = vmatprep.subr.mxu0 0.0
        %298 = vmatpush2.msra.mxu0 0.0
        %299 = vmatprep.subr.mxu0 0.0
        %300 = vmatpush2.msra.mxu0 0.0
        %301 = vmatprep.subr.mxu0 0.0
        %302 = vmatpush2.msra.mxu0 0.0
        %303 = vmatprep.subr.mxu0 0.0
        %304 = vmatpush2.msra.mxu0 0.0
        %305 = vmatprep.subr.mxu0 0.0
        %306 = vmatpush2.msra.mxu0 0.0
        %307 = vmatprep.subr.mxu0 0.0
        %308 = vmatpush2.msra.mxu0 0.0
        %309 = vmatprep.mubr.f32.mxu0 0.0
        %310 = vmatmul.mubr.f32.gmra.mxu0 %v241
        %v311 = vpop.f32.mrf.mxu0
        %v312 = vadd.f32 0.0, %v311
        %v313 = vpop.f32.mrf.mxu0
        %314 = vmatprep.mubr.f32.mxu0 0.0
        %315 = vmatmul.mubr.f32.gmra.mxu0 %v242
        %v316 = vpop.f32.mrf.mxu0
        %v317 = vadd.f32 0.0, %v316
        %v318 = vpop.f32.mrf.mxu0
        %319 = vmatprep.mubr.f32.mxu0 0.0
        %320 = vmatmul.mubr.f32.gmra.mxu0 %v243
        %v321 = vpop.f32.mrf.mxu0
        %v322 = vadd.f32 0.0, %v321
        %v323 = vpop.f32.mrf.mxu0
        %324 = vmatprep.mubr.f32.mxu0 0.0
        %325 = vmatmul.mubr.f32.gmra.mxu0 %v244
        %v326 = vpop.f32.mrf.mxu0
        %v327 = vadd.f32 0.0, %v326
        %v328 = vpop.f32.mrf.mxu0
        %329 = vdwg.mxu0
        %330 = vst [vmem:[%s170] sm:$0xff] %v312
        %331 = vst [vmem:[%s170 + $0x8] sm:$0xff] %v317
        %332 = vst [vmem:[%s170 + $0x10] sm:$0xff] %v322
        %333 = vst [vmem:[%s170 + $0x18] sm:$0xff] %v327
        %s334 = sand.u32 %s75, 1
        %s335 = scalar_lea.sflag [#allocation4], %s334
        %s336 = sand.u32 %s75, 1
        %s337 = smul.addr %s336, 32
        %s338 = scalar_lea.vmem [#allocation7], %s337
        // Predicated region
        $region37: #{tpu_custom_call.1} parent=27 // pred_check
          %p339 = pneg %p85
        $region38: #{tpu_custom_call.1} parent=27 // pred_check_branch
          %341 = sbr.rel (%p339) target = $region40
        $region39: #{tpu_custom_call.1} parent=27 // pred_region
          %s343 = ssub.s32 512, 512
          %344 = vsyncadd %s335, %s343
          %s345 = smul.addr %s20, 128
          %s346 = scalar_lea.hbm %s2, %s345
          %s347 = sshll.u32 %s338, 4
          %s348 = int_to_ptr.vmem [resolvable:$true] %s347
          %353 = dma.vmem_to_hbm [thread:$0]  %s348, 512, %s346, %s335, 128, 256, 8
        $region40: #{tpu_custom_call.1} parent=27 // pred_fallthru
          _
      $region28: #{tpu_custom_call.1} parent=5 // pred_fallthru
        _
      %p354 = scmp.le.s32.totalorder 2, %s15
      // Predicated region
      $region41: #{tpu_custom_call.1} parent=5 // pred_check
        %p355 = pneg %p354
      $region42: #{tpu_custom_call.1} parent=5 // pred_check_branch
        %357 = sbr.rel (%p355) target = $region44
      $region43: #{tpu_custom_call.1} parent=5 // pred_region
        %s358 = ssub.s32 %s15, 2
        // Predicated region
        $region45: #{tpu_custom_call.1} parent=43 // pred_check
          %p359 = pneg %p91
        $region46: #{tpu_custom_call.1} parent=43 // pred_check_branch
          %361 = sbr.rel (%p359) target = $region48
        $region47: #{tpu_custom_call.1} parent=43 // pred_region
          %s362 = sand.u32 %s76, 1
          %s363 = scalar_lea.sflag [#allocation4], %s362
          %s364 = sand.u32 %s76, 1
          %s365 = smul.addr %s364, 32
          %s366 = scalar_lea.vmem [#allocation7], %s365
          %367 = dma.done %s363, 512
        $region48: #{tpu_custom_call.1} parent=43 // pred_fallthru
          _
      $region44: #{tpu_custom_call.1} parent=5 // pred_fallthru
        _
    $region6: #{tpu_custom_call.1} parent=1 // loop_footer
      %s19 = sadd.s32 1, %s15
    $region7: #{tpu_custom_call.1} parent=1 // loop_footer_branch
      %14 = sbr.rel target = $region3
    $region8: #{tpu_custom_call.1} parent=1 // loop_exit
      _
    %368 = vsyncpa [#allocation3], 1
    %s369 = scalar_lea.sflag [#allocation3], 1
    %370 = vsyncpa %s369, 1
    %371 = vsyncpa [#allocation6], 1
    %372 = vsyncpa [#allocation4], 1
    %s373 = scalar_lea.sflag [#allocation4], 1
    %374 = vsyncpa %s373, 1

</llo_original>
